<compile_context>
chip_gen: v7x
topology: tpu7x:2x2x1
jax: 0.10.0
libtpu: 0.0.40
codegen_flags: <defaults>
</compile_context>

<pallas_src>
import functools

import jax
import jax.numpy as jnp
from jax.experimental import pallas as pl
from jax.experimental.pallas import tpu as pltpu


def _round_up(x, m):
    return (x + m - 1) // m * m


def critic_kernel(state_ref, act_ref, w1s_ref, w1a_ref, w2_ref,
                  b1_ref, b2_ref, w3_ref, b3_ref, out_ref):
    # state_ref: (tb, S)      batch tile of the state
    # act_ref:   (tb, P*A)    batch tile of the flattened actions
    # w1s_ref:   (S,   H1)    layer-1 rows for the state (zero-padded action cols)
    # w1a_ref:   (P*A, H1)    layer-1 rows for the actions (block-diag, zero-padded)
    # w2_ref:    (H1,  M2)
    # b1_ref:    (1, H1) f32 ; b2_ref: (1, M2) f32
    # w3_ref:    (8, M2) f32  head weight replicated over 8 sublanes
    # b3_ref:    (1, 1)  f32
    # out_ref:   (1, 1, tb)   lane-dense output row (batch in lanes)

    # ---- layer 1: fused state-linear + per-player action-linear (+ f32 bias), relu
    h1 = (jnp.dot(state_ref[...], w1s_ref[...], preferred_element_type=jnp.float32)
          + jnp.dot(act_ref[...], w1a_ref[...], preferred_element_type=jnp.float32)
          + b1_ref[...])
    h1 = jnp.maximum(h1, 0.0)

    # ---- layer 2 (+ f32 bias), relu (elementwise work stays f32 -- v5e friendly)
    h2 = jnp.dot(h1.astype(w2_ref.dtype), w2_ref[...],
                 preferred_element_type=jnp.float32) + b2_ref[...]
    h2 = jnp.maximum(h2, 0.0)

    # ---- head, emitted lane-dense: (8, M2) x (tb, M2)^T -> (8, tb); rows identical.
    y8 = jax.lax.dot_general(
        w3_ref[...], h2,
        dimension_numbers=(((1,), (1,)), ((), ())),
        preferred_element_type=jnp.float32)
    y = y8[0:1, :] + b3_ref[...]                        # (1, tb), batch in lanes
    out_ref[...] = y.reshape(out_ref.shape).astype(out_ref.dtype)


def prepare_params(params, n_players):
    """One-time fusion of the PyTorch-style parameters into kernel operands."""
    Ws, bs = params["Ws"], params["bs"]          # (S, 60), (60,)
    Wa, ba = params["Wa"], params["ba"]          # (A, am), (am,)
    W2, b2 = params["W2"], params["b2"]          # (60 + P*am, 30), (30,)
    W3, b3 = params["W3"], params["b3"]          # (30, 1), (1,)

    P = n_players
    A, am = Wa.shape
    sm = Ws.shape[1]

    # block-diagonal per-player action weight: (P*A, P*am)
    eye_p = jnp.eye(P, dtype=Wa.dtype)
    Wa_blk = jnp.einsum("pq,ao->paqo", eye_p, Wa).reshape(P * A, P * am)

    # layer-1 weight split into state rows / action rows, zero-padded to H1 cols
    W1s = jnp.concatenate([Ws, jnp.zeros((Ws.shape[0], P * am), Ws.dtype)], axis=1)
    W1a = jnp.concatenate([jnp.zeros((P * A, sm), Wa.dtype), Wa_blk], axis=1)

    # biases / head stay f32 regardless of the compute dtype
    b1 = jnp.concatenate([bs, jnp.tile(ba, (P,))])[None, :].astype(jnp.float32)
    b2r = b2[None, :].astype(jnp.float32)
    w3r = jnp.tile(W3[:, 0][None, :], (8, 1)).astype(jnp.float32)   # (8, M2)
    b3r = b3.reshape(1, 1).astype(jnp.float32)

    return dict(W1s=W1s, W1a=W1a, W2=W2, b1=b1, b2=b2r, w3r=w3r, b3=b3r)


@functools.partial(jax.jit, static_argnames=("tile_b", "compute_dtype"))
def critic_forward(state, actions, prepared, *, tile_b=4096,
                   compute_dtype=jnp.float32):
    """state: (B, S), actions: (B, P, A)  ->  logits (B, 1) f32."""
    B = state.shape[0]
    P, A = actions.shape[1], actions.shape[2]
    act = actions.reshape(B, P * A)              # metadata-only reshape, no HBM pass

    cdt = jnp.dtype(compute_dtype)
    W1s = prepared["W1s"].astype(cdt)
    W1a = prepared["W1a"].astype(cdt)
    W2 = prepared["W2"].astype(cdt)
    b1, b2, w3r, b3 = (prepared["b1"], prepared["b2"],
                       prepared["w3r"], prepared["b3"])

    S = state.shape[1]
    PA = act.shape[1]
    H1 = W1s.shape[1]
    M2 = W2.shape[1]

    # batch tile: multiple of the dtype's sublane packing (8 f32 / 16 bf16),
    # clamped to the batch; no jnp.pad -- the grid's last block may be partial.
    sub = 8 * (4 // cdt.itemsize)
    tb = max(sub, min(tile_b, _round_up(B, sub)))
    tb = _round_up(tb, sub)
    nb = pl.cdiv(B, tb)

    out = pl.pallas_call(
        critic_kernel,
        out_shape=jax.ShapeDtypeStruct((nb, 1, tb), jnp.float32),
        grid_spec=pltpu.PrefetchScalarGridSpec(
            num_scalar_prefetch=0,
            grid=(nb,),
            in_specs=[
                # batch-tiled activations (double-buffered by the pipeline)
                pl.BlockSpec((tb, S), lambda i: (i, 0)),
                pl.BlockSpec((tb, PA), lambda i: (i, 0)),
                # weights / biases: constant index_map -> stay resident in VMEM
                # TODO(synk): pipeline_mode=pl.Buffered(1) on these would save a
                # few KiB of pointless double-buffering; omitted for lowering
                # robustness (negligible here).
                pl.BlockSpec((S, H1), lambda i: (0, 0)),
                pl.BlockSpec((PA, H1), lambda i: (0, 0)),
                pl.BlockSpec((H1, M2), lambda i: (0, 0)),
                pl.BlockSpec((1, H1), lambda i: (0, 0)),
                pl.BlockSpec((1, M2), lambda i: (0, 0)),
                pl.BlockSpec((8, M2), lambda i: (0, 0)),
                pl.BlockSpec((1, 1), lambda i: (0, 0)),
            ],
            # lane-dense output: one (1, 1, tb) row per grid step
            out_specs=pl.BlockSpec((1, 1, tb), lambda i: (i, 0, 0)),
        ),
        compiler_params=pltpu.CompilerParams(
            dimension_semantics=("parallel",),      # megacore sharding on v7x
            vmem_limit_bytes=32 * 1024 * 1024,
        ),
    )(state.astype(cdt), act.astype(cdt), W1s, W1a, W2, b1, b2, w3r, b3)

    return out.reshape(-1)[:B][:, None]


def init_params(key, state_space, action_space, n_players,
                state_mid_dim=60, action_mid_dim=2, mid_dim_2=30):
    """Deterministic normal(0, 0.1) init, mirroring _reset_parameters()."""
    ks = jax.random.split(key, 8)
    std = 0.1
    # weights stored as (in_features, out_features) == PyTorch weight.T
    Ws = std * jax.random.normal(ks[0], (state_space, state_mid_dim), jnp.float32)
    bs = std * jax.random.normal(ks[1], (state_mid_dim,), jnp.float32)
    Wa = std * jax.random.normal(ks[2], (action_space, action_mid_dim), jnp.float32)
    ba = std * jax.random.normal(ks[3], (action_mid_dim,), jnp.float32)
    in2 = state_mid_dim + n_players * action_mid_dim
    W2 = std * jax.random.normal(ks[4], (in2, mid_dim_2), jnp.float32)
    b2 = std * jax.random.normal(ks[5], (mid_dim_2,), jnp.float32)
    W3 = std * jax.random.normal(ks[6], (mid_dim_2, 1), jnp.float32)
    b3 = std * jax.random.normal(ks[7], (1,), jnp.float32)
    return dict(Ws=Ws, bs=bs, Wa=Wa, ba=ba, W2=W2, b2=b2, W3=W3, b3=b3)


def _reference(state, actions, params):
    """Pure-JAX reference of the PyTorch forward (for correctness check)."""
    B = actions.shape[0]
    hs = state @ params["Ws"] + params["bs"]
    ha = actions @ params["Wa"] + params["ba"]            # (B, P, am)
    h = jnp.concatenate([hs, ha.reshape(B, -1)], axis=1)
    h = jax.nn.relu(h)
    h2 = jax.nn.relu(h @ params["W2"] + params["b2"])
    return h2 @ params["W3"] + params["b3"]


if __name__ == "__main__":
    key = jax.random.PRNGKey(0)
    k_param, k_s1, k_a1, k_s2, k_a2, k_s3, k_a3 = jax.random.split(key, 7)

    state_space, action_space, n_players = 16, 4, 3
    params = init_params(k_param, state_space, action_space, n_players)
    prepared = prepare_params(params, n_players)

    # 1) small single-tile f32 check
    B1 = 8
    s1 = jax.random.normal(k_s1, (B1, state_space), jnp.float32)
    a1 = jax.random.normal(k_a1, (B1, n_players, action_space), jnp.float32)
    o1 = jax.block_until_ready(critic_forward(s1, a1, prepared))
    r1 = _reference(s1, a1, params)
    assert o1.shape == (B1, 1)
    assert float(jnp.max(jnp.abs(o1 - r1))) < 5e-3, "mismatch vs reference (f32)"

    # 2) multi-tile grid with a partial last block (no wrapper pad), f32
    B2 = 200
    s2 = jax.random.normal(k_s2, (B2, state_space), jnp.float32)
    a2 = jax.random.normal(k_a2, (B2, n_players, action_space), jnp.float32)
    o2 = jax.block_until_ready(critic_forward(s2, a2, prepared, tile_b=64))
    r2 = _reference(s2, a2, params)
    assert o2.shape == (B2, 1)
    assert float(jnp.max(jnp.abs(o2 - r2))) < 5e-3, "mismatch vs reference (gridded f32)"

    # 3) bf16 compute path (activations/weights bf16; biases, relu, accum in f32)
    B3 = 40
    s3 = jax.random.normal(k_s3, (B3, state_space), jnp.float32)
    a3 = jax.random.normal(k_a3, (B3, n_players, action_space), jnp.float32)
    o3 = jax.block_until_ready(
        critic_forward(s3, a3, prepared, tile_b=32, compute_dtype=jnp.bfloat16))
    r3 = _reference(s3, a3, params)
    assert o3.shape == (B3, 1)
    assert float(jnp.max(jnp.abs(o3 - r3))) < 5e-2, "mismatch vs reference (bf16)"

    print("KERNEL_OK")
</pallas_src>

<mosaic_0001>
module attributes {stable_mosaic.version = 11 : i64} {
  func.func @critic_kernel(%arg0: i32, %arg1: memref<8x16xf32, #tpu.memory_space<vmem>>, %arg2: memref<8x12xf32, #tpu.memory_space<vmem>>, %arg3: memref<16x66xf32, #tpu.memory_space<vmem>>, %arg4: memref<12x66xf32, #tpu.memory_space<vmem>>, %arg5: memref<66x30xf32, #tpu.memory_space<vmem>>, %arg6: memref<1x66xf32, #tpu.memory_space<vmem>>, %arg7: memref<1x30xf32, #tpu.memory_space<vmem>>, %arg8: memref<8x30xf32, #tpu.memory_space<vmem>>, %arg9: memref<1x1xf32, #tpu.memory_space<vmem>>, %arg10: memref<1x1x8xf32, #tpu.memory_space<vmem>>) attributes {dimension_semantics = [#tpu.dimension_semantics<parallel>], iteration_bounds = array<i64: 1>, scalar_prefetch = 0 : i64, scratch_operands = 0 : i64, tpu.core_type = #tpu.core_type<tc>, window_params = [{transform_indices = @transform_0, window_bounds = array<i64: 8, 16>}, {transform_indices = @transform_1, window_bounds = array<i64: 8, 12>}, {pipeline_mode = #tpu.pipeline_mode<synchronous>, transform_indices = @transform_2, window_bounds = array<i64: 16, 66>}, {pipeline_mode = #tpu.pipeline_mode<synchronous>, transform_indices = @transform_3, window_bounds = array<i64: 12, 66>}, {pipeline_mode = #tpu.pipeline_mode<synchronous>, transform_indices = @transform_4, window_bounds = array<i64: 66, 30>}, {pipeline_mode = #tpu.pipeline_mode<synchronous>, transform_indices = @transform_5, window_bounds = array<i64: 1, 66>}, {pipeline_mode = #tpu.pipeline_mode<synchronous>, transform_indices = @transform_6, window_bounds = array<i64: 1, 30>}, {pipeline_mode = #tpu.pipeline_mode<synchronous>, transform_indices = @transform_7, window_bounds = array<i64: 8, 30>}, {pipeline_mode = #tpu.pipeline_mode<synchronous>, transform_indices = @transform_8, window_bounds = array<i64: 1, 1>}, {transform_indices = @transform_9, window_bounds = array<i64: 1, 1, 8>}]} {
    %c0 = arith.constant 0 : index
    %c0_0 = arith.constant 0 : index
    %0 = vector.load %arg1[%c0, %c0_0] : memref<8x16xf32, #tpu.memory_space<vmem>>, vector<8x16xf32>
    %c0_1 = arith.constant 0 : index
    %c0_2 = arith.constant 0 : index
    %1 = vector.load %arg3[%c0_1, %c0_2] : memref<16x66xf32, #tpu.memory_space<vmem>>, vector<16x66xf32>
    %cst = arith.constant dense<0.000000e+00> : vector<8x66xf32>
    %2 = tpu.matmul %0, %1, %cst {dimension_numbers = #tpu.dot_dimension_numbers<[1], [0], [0], [1], [0, 0, 1, 1], [], []>} : vector<8x16xf32>, vector<16x66xf32>, vector<8x66xf32> -> vector<8x66xf32>
    %c0_3 = arith.constant 0 : index
    %c0_4 = arith.constant 0 : index
    %3 = vector.load %arg2[%c0_3, %c0_4] : memref<8x12xf32, #tpu.memory_space<vmem>>, vector<8x12xf32>
    %c0_5 = arith.constant 0 : index
    %c0_6 = arith.constant 0 : index
    %4 = vector.load %arg4[%c0_5, %c0_6] : memref<12x66xf32, #tpu.memory_space<vmem>>, vector<12x66xf32>
    %cst_7 = arith.constant dense<0.000000e+00> : vector<8x66xf32>
    %5 = tpu.matmul %3, %4, %cst_7 {dimension_numbers = #tpu.dot_dimension_numbers<[1], [0], [0], [1], [0, 0, 1, 1], [], []>} : vector<8x12xf32>, vector<12x66xf32>, vector<8x66xf32> -> vector<8x66xf32>
    %6 = arith.addf %2, %5 : vector<8x66xf32>
    %c0_8 = arith.constant 0 : index
    %c0_9 = arith.constant 0 : index
    %7 = vector.load %arg6[%c0_8, %c0_9] : memref<1x66xf32, #tpu.memory_space<vmem>>, vector<1x66xf32>
    %8 = vector.broadcast %7 : vector<1x66xf32> to vector<8x66xf32>
    %9 = arith.addf %6, %8 : vector<8x66xf32>
    %cst_10 = arith.constant 0.000000e+00 : f32
    %10 = vector.broadcast %cst_10 : f32 to vector<8x66xf32>
    %11 = arith.maximumf %9, %10 : vector<8x66xf32>
    %c0_11 = arith.constant 0 : index
    %c0_12 = arith.constant 0 : index
    %12 = vector.load %arg5[%c0_11, %c0_12] : memref<66x30xf32, #tpu.memory_space<vmem>>, vector<66x30xf32>
    %cst_13 = arith.constant dense<0.000000e+00> : vector<8x30xf32>
    %13 = tpu.matmul %11, %12, %cst_13 {dimension_numbers = #tpu.dot_dimension_numbers<[1], [0], [0], [1], [0, 0, 1, 1], [], []>} : vector<8x66xf32>, vector<66x30xf32>, vector<8x30xf32> -> vector<8x30xf32>
    %c0_14 = arith.constant 0 : index
    %c0_15 = arith.constant 0 : index
    %14 = vector.load %arg7[%c0_14, %c0_15] : memref<1x30xf32, #tpu.memory_space<vmem>>, vector<1x30xf32>
    %15 = vector.broadcast %14 : vector<1x30xf32> to vector<8x30xf32>
    %16 = arith.addf %13, %15 : vector<8x30xf32>
    %cst_16 = arith.constant 0.000000e+00 : f32
    %17 = vector.broadcast %cst_16 : f32 to vector<8x30xf32>
    %18 = arith.maximumf %16, %17 : vector<8x30xf32>
    %c0_17 = arith.constant 0 : index
    %c0_18 = arith.constant 0 : index
    %19 = vector.load %arg8[%c0_17, %c0_18] : memref<8x30xf32, #tpu.memory_space<vmem>>, vector<8x30xf32>
    %cst_19 = arith.constant dense<0.000000e+00> : vector<8x8xf32>
    %20 = tpu.matmul %19, %18, %cst_19 {dimension_numbers = #tpu.dot_dimension_numbers<[1], [1], [0], [0], [0, 0, 1, 0], [], []>} : vector<8x30xf32>, vector<8x30xf32>, vector<8x8xf32> -> vector<8x8xf32>
    %21 = vector.extract_strided_slice %20 {offsets = [0, 0], sizes = [1, 8], strides = [1, 1]} : vector<8x8xf32> to vector<1x8xf32>
    %c0_20 = arith.constant 0 : index
    %c0_21 = arith.constant 0 : index
    %22 = vector.load %arg9[%c0_20, %c0_21] : memref<1x1xf32, #tpu.memory_space<vmem>>, vector<1x1xf32>
    %23 = vector.broadcast %22 : vector<1x1xf32> to vector<1x8xf32>
    %24 = arith.addf %21, %23 : vector<1x8xf32>
    %25 = vector.shape_cast %24 : vector<1x8xf32> to vector<1x1x8xf32>
    %c0_22 = arith.constant 0 : index
    %c0_23 = arith.constant 0 : index
    %c0_24 = arith.constant 0 : index
    %26 = vector.load %arg10[%c0_22, %c0_23, %c0_24] : memref<1x1x8xf32, #tpu.memory_space<vmem>>, vector<1x1x8xf32>
    tpu.vector_store %arg10[%c0_22, %c0_23, %c0_24], %25 {strides = array<i32>} : memref<1x1x8xf32, #tpu.memory_space<vmem>>, vector<1x1x8xf32>,
    return
  }
  func.func @transform_0(%arg0: i32) -> (i32, i32) {
    %c0_i32 = arith.constant 0 : i32
    %c0_i32_0 = arith.constant 0 : i32
    return %arg0, %c0_i32 : i32, i32
  }
  func.func @transform_1(%arg0: i32) -> (i32, i32) {
    %c0_i32 = arith.constant 0 : i32
    %c0_i32_0 = arith.constant 0 : i32
    return %arg0, %c0_i32 : i32, i32
  }
  func.func @transform_2(%arg0: i32) -> (i32, i32) {
    %c0_i32 = arith.constant 0 : i32
    %c0_i32_0 = arith.constant 0 : i32
    %c0_i32_1 = arith.constant 0 : i32
    return %c0_i32, %c0_i32_0 : i32, i32
  }
  func.func @transform_3(%arg0: i32) -> (i32, i32) {
    %c0_i32 = arith.constant 0 : i32
    %c0_i32_0 = arith.constant 0 : i32
    %c0_i32_1 = arith.constant 0 : i32
    return %c0_i32, %c0_i32_0 : i32, i32
  }
  func.func @transform_4(%arg0: i32) -> (i32, i32) {
    %c0_i32 = arith.constant 0 : i32
    %c0_i32_0 = arith.constant 0 : i32
    %c0_i32_1 = arith.constant 0 : i32
    return %c0_i32, %c0_i32_0 : i32, i32
  }
  func.func @transform_5(%arg0: i32) -> (i32, i32) {
    %c0_i32 = arith.constant 0 : i32
    %c0_i32_0 = arith.constant 0 : i32
    %c0_i32_1 = arith.constant 0 : i32
    return %c0_i32, %c0_i32_0 : i32, i32
  }
  func.func @transform_6(%arg0: i32) -> (i32, i32) {
    %c0_i32 = arith.constant 0 : i32
    %c0_i32_0 = arith.constant 0 : i32
    %c0_i32_1 = arith.constant 0 : i32
    return %c0_i32, %c0_i32_0 : i32, i32
  }
  func.func @transform_7(%arg0: i32) -> (i32, i32) {
    %c0_i32 = arith.constant 0 : i32
    %c0_i32_0 = arith.constant 0 : i32
    %c0_i32_1 = arith.constant 0 : i32
    return %c0_i32, %c0_i32_0 : i32, i32
  }
  func.func @transform_8(%arg0: i32) -> (i32, i32) {
    %c0_i32 = arith.constant 0 : i32
    %c0_i32_0 = arith.constant 0 : i32
    %c0_i32_1 = arith.constant 0 : i32
    return %c0_i32, %c0_i32_0 : i32, i32
  }
  func.func @transform_9(%arg0: i32) -> (i32, i32, i32) {
    %c0_i32 = arith.constant 0 : i32
    %c0_i32_0 = arith.constant 0 : i32
    %c0_i32_1 = arith.constant 0 : i32
    return %arg0, %c0_i32, %c0_i32_0 : i32, i32, i32
  }
}

</mosaic_0001>

<llo_original>
// kernel: critic_forward.1
$region0: #{critic_forward.1}
  #allocation0 [shape = 'u32[]', space=smem, size = 0x4, offset = 0x4, fixed_abs, tag = 'smem constant byte address 0x4 - core index']
  #allocation1 [shape = 'u32[144,128]{1,0:T(1,128)}', space=vmem, size = 0x12000, scoped, tag = 'internal scratch']
  #allocation2 [shape = 'f32[1,1]{1,0:T(1,128)S(1)}', space=vmem, size = 0x200, scoped, tag = 'scoped memory for critic_forward.1']
  %s0 = inlined_call_operand.vmem [shape: f32[8,16], index: 0, kind: input, shape index: {}]
  %s1 = inlined_call_operand.vmem [shape: f32[8,12], index: 1, kind: input, shape index: {}]
  %s2 = inlined_call_operand.vmem [shape: f32[16,66], index: 2, kind: input, shape index: {}]
  %s3 = inlined_call_operand.vmem [shape: f32[12,66], index: 3, kind: input, shape index: {}]
  %s4 = inlined_call_operand.vmem [shape: f32[66,30], index: 4, kind: input, shape index: {}]
  %s5 = inlined_call_operand.vmem [shape: f32[1,66], index: 5, kind: input, shape index: {}]
  %s6 = inlined_call_operand.vmem [shape: f32[1,30], index: 6, kind: input, shape index: {}]
  %s7 = inlined_call_operand.vmem [shape: f32[8,30], index: 7, kind: input, shape index: {}]
  %s8 = inlined_call_operand.<no memory space> [shape: f32[1,1], index: 8, kind: input, shape index: {}]
  %s9 = inlined_call_operand.hbm [shape: f32[1,1,8], index: 9, kind: output, shape index: {}]
  %s10 = sld [smem:[#allocation0]]
  $region46: #{critic_forward.1} parent=0
    _
  %s12 = ssub.s32 1, %s10
  %s13 = scalar_select 0, %s12, %s10
  %v14 = vstv %s8
  %15 = vst [vmem:[#allocation2] sm:$0x1] %v14
  $region1: #{critic_forward.1} parent=0
    #allocation3 [shape = 'u8[512]{0}', space=vmem, size = 0x400, scoped, tag = 'output window, operand 0, single buffered']
    #allocation4 [shape = 's32[1]{0}', space=sflag, size = 0x4, scoped, tag = 'scoped memory for critic_forward.1']
    %16 = vsyncpa [#allocation4], 0
    // Predicated region
    $region2: #{critic_forward.1} parent=1 // pred_check
      _
    $region3: #{critic_forward.1} parent=1 // pred_check_branch
      %18 = sbr.rel (0) target = $region5
    $region4: #{critic_forward.1} parent=1 // pred_region
      _
    $region5: #{critic_forward.1} parent=1 // pred_fallthru
      _
    // Predicated region
    $region6: #{critic_forward.1} parent=1 // pred_check
      _
    $region7: #{critic_forward.1} parent=1 // pred_check_branch
      %20 = sbr.rel (0) target = $region9
    $region8: #{critic_forward.1} parent=1 // pred_region
      _
    $region9: #{critic_forward.1} parent=1 // pred_fallthru
      _
    // Predicated region
    $region10: #{critic_forward.1} parent=1 // pred_check
      _
    $region11: #{critic_forward.1} parent=1 // pred_check_branch
      %22 = sbr.rel (0) target = $region13
    $region12: #{critic_forward.1} parent=1 // pred_region
      _
    $region13: #{critic_forward.1} parent=1 // pred_fallthru
      _
    // Predicated region
    $region14: #{critic_forward.1} parent=1 // pred_check
      _
    $region15: #{critic_forward.1} parent=1 // pred_check_branch
      %24 = sbr.rel (0) target = $region17
    $region16: #{critic_forward.1} parent=1 // pred_region
      _
    $region17: #{critic_forward.1} parent=1 // pred_fallthru
      _
    // Predicated region
    $region18: #{critic_forward.1} parent=1 // pred_check
      _
    $region19: #{critic_forward.1} parent=1 // pred_check_branch
      %26 = sbr.rel (0) target = $region21
    $region20: #{critic_forward.1} parent=1 // pred_region
      _
    $region21: #{critic_forward.1} parent=1 // pred_fallthru
      _
    // Predicated region
    $region22: #{critic_forward.1} parent=1 // pred_check
      _
    $region23: #{critic_forward.1} parent=1 // pred_check_branch
      %28 = sbr.rel (0) target = $region25
    $region24: #{critic_forward.1} parent=1 // pred_region
      _
    $region25: #{critic_forward.1} parent=1 // pred_fallthru
      _
    // Predicated region
    $region26: #{critic_forward.1} parent=1 // pred_check
      _
    $region27: #{critic_forward.1} parent=1 // pred_check_branch
      %30 = sbr.rel (0) target = $region29
    $region28: #{critic_forward.1} parent=1 // pred_region
      _
    $region29: #{critic_forward.1} parent=1 // pred_fallthru
      _
    // Predicated region
    $region30: #{critic_forward.1} parent=1 // pred_check
      _
    $region31: #{critic_forward.1} parent=1 // pred_check_branch
      %32 = sbr.rel (0) target = $region33
    $region32: #{critic_forward.1} parent=1 // pred_region
      _
    $region33: #{critic_forward.1} parent=1 // pred_fallthru
      _
    // Predicated region
    $region34: #{critic_forward.1} parent=1 // pred_check
      _
    $region35: #{critic_forward.1} parent=1 // pred_check_branch
      %34 = sbr.rel (0) target = $region37
    $region36: #{critic_forward.1} parent=1 // pred_region
      _
    $region37: #{critic_forward.1} parent=1 // pred_fallthru
      _
    %v35 = vld [vmem:[%s0] sm:$0xff]
    %v36 = vld [vmem:[%s2] sm:$0xff]
    %v37 = vld [vmem:[%s2 + $0x8] sm:$0xff]
    %v38 = vld [vmem:[%s1] sm:$0xff]
    %v39 = vld [vmem:[%s3] sm:$0xff]
    %v40 = vld [vmem:[%s3 + $0x8] sm:$0xf]
    %vm41 = vcmask 97280
    %v43 = vsel %vm41, %v38, 0
    %vm45 = vcmask 1043456
    %v47 = vsel %vm45, %v40, 0
    %49 = vmatprep.subr.mxu0 0.0
    %50 = vmatpush1.msra.mxu0 %v39
    %51 = vmatprep.subr.mxu0 0.0
    %52 = vmatpush1.msra.mxu0 %v47
    %53 = vmatprep.subr.mxu0 0.0
    %54 = vmatpush1.msra.mxu0 0.0
    %55 = vmatprep.subr.mxu0 0.0
    %56 = vmatpush1.msra.mxu0 0.0
    %57 = vmatprep.subr.mxu0 0.0
    %58 = vmatpush1.msra.mxu0 0.0
    %59 = vmatprep.subr.mxu0 0.0
    %60 = vmatpush1.msra.mxu0 0.0
    %61 = vmatprep.subr.mxu0 0.0
    %62 = vmatpush1.msra.mxu0 0.0
    %63 = vmatprep.subr.mxu0 0.0
    %64 = vmatpush1.msra.mxu0 0.0
    %65 = vmatprep.subr.mxu0 0.0
    %66 = vmatpush1.msra.mxu0 0.0
    %67 = vmatprep.subr.mxu0 0.0
    %68 = vmatpush1.msra.mxu0 0.0
    %69 = vmatprep.subr.mxu0 0.0
    %70 = vmatpush1.msra.mxu0 0.0
    %71 = vmatprep.subr.mxu0 0.0
    %72 = vmatpush1.msra.mxu0 0.0
    %73 = vmatprep.subr.mxu0 0.0
    %74 = vmatpush1.msra.mxu0 0.0
    %75 = vmatprep.subr.mxu0 0.0
    %76 = vmatpush1.msra.mxu0 0.0
    %77 = vmatprep.subr.mxu0 0.0
    %78 = vmatpush1.msra.mxu0 0.0
    %79 = vmatprep.subr.mxu0 0.0
    %80 = vmatpush1.msra.mxu0 0.0
    %81 = vmatprep.subr.mxu0 0.0
    %82 = vmatpush1.msra.mxu0 0.0
    %83 = vmatprep.subr.mxu0 0.0
    %84 = vmatpush1.msra.mxu0 0.0
    %85 = vmatprep.subr.mxu0 0.0
    %86 = vmatpush1.msra.mxu0 0.0
    %87 = vmatprep.subr.mxu0 0.0
    %88 = vmatpush1.msra.mxu0 0.0
    %89 = vmatprep.subr.mxu0 0.0
    %90 = vmatpush1.msra.mxu0 0.0
    %91 = vmatprep.subr.mxu0 0.0
    %92 = vmatpush1.msra.mxu0 0.0
    %93 = vmatprep.subr.mxu0 0.0
    %94 = vmatpush1.msra.mxu0 0.0
    %95 = vmatprep.subr.mxu0 0.0
    %96 = vmatpush1.msra.mxu0 0.0
    %97 = vmatprep.subr.mxu0 0.0
    %98 = vmatpush1.msra.mxu0 0.0
    %99 = vmatprep.subr.mxu0 0.0
    %100 = vmatpush1.msra.mxu0 0.0
    %101 = vmatprep.subr.mxu0 0.0
    %102 = vmatpush1.msra.mxu0 0.0
    %103 = vmatprep.subr.mxu0 0.0
    %104 = vmatpush1.msra.mxu0 0.0
    %105 = vmatprep.subr.mxu0 0.0
    %106 = vmatpush1.msra.mxu0 0.0
    %107 = vmatprep.subr.mxu0 0.0
    %108 = vmatpush1.msra.mxu0 0.0
    %109 = vmatprep.subr.mxu0 0.0
    %110 = vmatpush1.msra.mxu0 0.0
    %111 = vmatprep.subr.mxu0 0.0
    %112 = vmatpush1.msra.mxu0 0.0
    %113 = vmatprep.mubr.f32.mxu0 0.0
    %114 = vmatmul.mubr.f32.gmra.mrb[0].mxu0 %v43
    %v115 = vpop.f32.mrb[0].mxu0
    %v116 = vadd.f32 0.0, %v115
    %v117 = vpop.f32.mrb[0].mxu0
    %118 = vdwg.mxu0
    %vm119 = vcmask 130048
    %v121 = vsel %vm119, %v35, 0
    %123 = vmatprep.subr.mxu0 0.0
    %124 = vmatpush1.msra.mxu0 %v36
    %125 = vmatprep.subr.mxu0 0.0
    %126 = vmatpush1.msra.mxu0 %v37
    %127 = vmatprep.subr.mxu0 0.0
    %128 = vmatpush1.msra.mxu0 0.0
    %129 = vmatprep.subr.mxu0 0.0
    %130 = vmatpush1.msra.mxu0 0.0
    %131 = vmatprep.subr.mxu0 0.0
    %132 = vmatpush1.msra.mxu0 0.0
    %133 = vmatprep.subr.mxu0 0.0
    %134 = vmatpush1.msra.mxu0 0.0
    %135 = vmatprep.subr.mxu0 0.0
    %136 = vmatpush1.msra.mxu0 0.0
    %137 = vmatprep.subr.mxu0 0.0
    %138 = vmatpush1.msra.mxu0 0.0
    %139 = vmatprep.subr.mxu0 0.0
    %140 = vmatpush1.msra.mxu0 0.0
    %141 = vmatprep.subr.mxu0 0.0
    %142 = vmatpush1.msra.mxu0 0.0
    %143 = vmatprep.subr.mxu0 0.0
    %144 = vmatpush1.msra.mxu0 0.0
    %145 = vmatprep.subr.mxu0 0.0
    %146 = vmatpush1.msra.mxu0 0.0
    %147 = vmatprep.subr.mxu0 0.0
    %148 = vmatpush1.msra.mxu0 0.0
    %149 = vmatprep.subr.mxu0 0.0
    %150 = vmatpush1.msra.mxu0 0.0
    %151 = vmatprep.subr.mxu0 0.0
    %152 = vmatpush1.msra.mxu0 0.0
    %153 = vmatprep.subr.mxu0 0.0
    %154 = vmatpush1.msra.mxu0 0.0
    %155 = vmatprep.subr.mxu0 0.0
    %156 = vmatpush1.msra.mxu0 0.0
    %157 = vmatprep.subr.mxu0 0.0
    %158 = vmatpush1.msra.mxu0 0.0
    %159 = vmatprep.subr.mxu0 0.0
    %160 = vmatpush1.msra.mxu0 0.0
    %161 = vmatprep.subr.mxu0 0.0
    %162 = vmatpush1.msra.mxu0 0.0
    %163 = vmatprep.subr.mxu0 0.0
    %164 = vmatpush1.msra.mxu0 0.0
    %165 = vmatprep.subr.mxu0 0.0
    %166 = vmatpush1.msra.mxu0 0.0
    %167 = vmatprep.subr.mxu0 0.0
    %168 = vmatpush1.msra.mxu0 0.0
    %169 = vmatprep.subr.mxu0 0.0
    %170 = vmatpush1.msra.mxu0 0.0
    %171 = vmatprep.subr.mxu0 0.0
    %172 = vmatpush1.msra.mxu0 0.0
    %173 = vmatprep.subr.mxu0 0.0
    %174 = vmatpush1.msra.mxu0 0.0
    %175 = vmatprep.subr.mxu0 0.0
    %176 = vmatpush1.msra.mxu0 0.0
    %177 = vmatprep.subr.mxu0 0.0
    %178 = vmatpush1.msra.mxu0 0.0
    %179 = vmatprep.subr.mxu0 0.0
    %180 = vmatpush1.msra.mxu0 0.0
    %181 = vmatprep.subr.mxu0 0.0
    %182 = vmatpush1.msra.mxu0 0.0
    %183 = vmatprep.subr.mxu0 0.0
    %184 = vmatpush1.msra.mxu0 0.0
    %185 = vmatprep.subr.mxu0 0.0
    %186 = vmatpush1.msra.mxu0 0.0
    %187 = vmatprep.mubr.f32.mxu0 0.0
    %188 = vmatmul.mubr.f32.gmra.mrb[0].mxu0 %v121
    %v189 = vpop.f32.mrb[0].mxu0
    %v190 = vadd.f32 %v116, %v189
    %v191 = vpop.f32.mrb[0].mxu0
    %192 = vdwg.mxu0
    %v193 = vld [vmem:[%s5] sm:$0x1]
    %v195 = vlaneseq
    %v196 = vshrl.u32 %v195, 7
    %v197 = vsub.s32 0, %v196
    %v198 = vrot.slane %v193, %v197
    %v200 = vadd.f32 %v190, %v198
    %v201 = vmax.f32 %v200, 0.0
    %v202 = vld [vmem:[%s4] sm:$0xff]
    %v203 = vld [vmem:[%s4 + $0x8] sm:$0xff]
    %v204 = vld [vmem:[%s4 + $0x10] sm:$0xff]
    %v205 = vld [vmem:[%s4 + $0x18] sm:$0xff]
    %v206 = vld [vmem:[%s4 + $0x20] sm:$0xff]
    %v207 = vld [vmem:[%s4 + $0x28] sm:$0xff]
    %v208 = vld [vmem:[%s4 + $0x30] sm:$0xff]
    %v209 = vld [vmem:[%s4 + $0x38] sm:$0xff]
    %v210 = vld [vmem:[%s4 + $0x40] sm:$0x3]
    %v211 = vld [vmem:[%s6] sm:$0x1]
    %v213 = vlaneseq
    %v214 = vshrl.u32 %v213, 7
    %v215 = vsub.s32 0, %v214
    %v216 = vrot.slane %v211, %v215
    %vm218 = vcmask 539648
    %v220 = vsel %vm218, %v201, 0
    %vm222 = vcmask 1041408
    %v224 = vsel %vm222, %v210, 0
    %226 = vmatprep.subr.mxu0 0.0
    %227 = vmatpush1.msra.mxu0 %v202
    %228 = vmatprep.subr.mxu0 0.0
    %229 = vmatpush1.msra.mxu0 %v203
    %230 = vmatprep.subr.mxu0 0.0
    %231 = vmatpush1.msra.mxu0 %v204
    %232 = vmatprep.subr.mxu0 0.0
    %233 = vmatpush1.msra.mxu0 %v205
    %234 = vmatprep.subr.mxu0 0.0
    %235 = vmatpush1.msra.mxu0 %v206
    %236 = vmatprep.subr.mxu0 0.0
    %237 = vmatpush1.msra.mxu0 %v207
    %238 = vmatprep.subr.mxu0 0.0
    %239 = vmatpush1.msra.mxu0 %v208
    %240 = vmatprep.subr.mxu0 0.0
    %241 = vmatpush1.msra.mxu0 %v209
    %242 = vmatprep.subr.mxu0 0.0
    %243 = vmatpush1.msra.mxu0 %v224
    %244 = vmatprep.subr.mxu0 0.0
    %245 = vmatpush1.msra.mxu0 0.0
    %246 = vmatprep.subr.mxu0 0.0
    %247 = vmatpush1.msra.mxu0 0.0
    %248 = vmatprep.subr.mxu0 0.0
    %249 = vmatpush1.msra.mxu0 0.0
    %250 = vmatprep.subr.mxu0 0.0
    %251 = vmatpush1.msra.mxu0 0.0
    %252 = vmatprep.subr.mxu0 0.0
    %253 = vmatpush1.msra.mxu0 0.0
    %254 = vmatprep.subr.mxu0 0.0
    %255 = vmatpush1.msra.mxu0 0.0
    %256 = vmatprep.subr.mxu0 0.0
    %257 = vmatpush1.msra.mxu0 0.0
    %258 = vmatprep.subr.mxu0 0.0
    %259 = vmatpush1.msra.mxu0 0.0
    %260 = vmatprep.subr.mxu0 0.0
    %261 = vmatpush1.msra.mxu0 0.0
    %262 = vmatprep.subr.mxu0 0.0
    %263 = vmatpush1.msra.mxu0 0.0
    %264 = vmatprep.subr.mxu0 0.0
    %265 = vmatpush1.msra.mxu0 0.0
    %266 = vmatprep.subr.mxu0 0.0
    %267 = vmatpush1.msra.mxu0 0.0
    %268 = vmatprep.subr.mxu0 0.0
    %269 = vmatpush1.msra.mxu0 0.0
    %270 = vmatprep.subr.mxu0 0.0
    %271 = vmatpush1.msra.mxu0 0.0
    %272 = vmatprep.subr.mxu0 0.0
    %273 = vmatpush1.msra.mxu0 0.0
    %274 = vmatprep.subr.mxu0 0.0
    %275 = vmatpush1.msra.mxu0 0.0
    %276 = vmatprep.subr.mxu0 0.0
    %277 = vmatpush1.msra.mxu0 0.0
    %278 = vmatprep.subr.mxu0 0.0
    %279 = vmatpush1.msra.mxu0 0.0
    %280 = vmatprep.subr.mxu0 0.0
    %281 = vmatpush1.msra.mxu0 0.0
    %282 = vmatprep.subr.mxu0 0.0
    %283 = vmatpush1.msra.mxu0 0.0
    %284 = vmatprep.subr.mxu0 0.0
    %285 = vmatpush1.msra.mxu0 0.0
    %286 = vmatprep.subr.mxu0 0.0
    %287 = vmatpush1.msra.mxu0 0.0
    %288 = vmatprep.subr.mxu0 0.0
    %289 = vmatpush1.msra.mxu0 0.0
    %290 = vmatprep.mubr.f32.mxu0 0.0
    %291 = vmatmul.mubr.f32.gmra.mrb[0].mxu0 %v220
    %v292 = vpop.f32.mrb[0].mxu0
    %v293 = vadd.f32 %v216, %v292
    %v294 = vpop.f32.mrb[0].mxu0
    %295 = vdwg.mxu0
    %v296 = vmax.f32 %v293, 0.0
    %v297 = vld [vmem:[%s7] sm:$0xff]
    %vm298 = vcmask 244736
    %v300 = vsel %vm298, %v297, 0
    %v303 = vsel %vm298, %v296, 0
    %305 = vmatprep.subr.mxu0 0.0
    %306 = vmatpush1.xpose.msra.mxu0 %v303
    %307 = vmatprep.subr.mxu0 0.0
    %308 = vmatpush1.xpose.msra.mxu0 0.0
    %309 = vmatprep.subr.mxu0 0.0
    %310 = vmatpush1.xpose.msra.mxu0 0.0
    %311 = vmatprep.subr.mxu0 0.0
    %312 = vmatpush1.xpose.msra.mxu0 0.0
    %313 = vmatprep.subr.mxu0 0.0
    %314 = vmatpush1.xpose.msra.mxu0 0.0
    %315 = vmatprep.subr.mxu0 0.0
    %316 = vmatpush1.xpose.msra.mxu0 0.0
    %317 = vmatprep.subr.mxu0 0.0
    %318 = vmatpush1.xpose.msra.mxu0 0.0
    %319 = vmatprep.subr.mxu0 0.0
    %320 = vmatpush1.xpose.msra.mxu0 0.0
    %321 = vmatprep.subr.mxu0 0.0
    %322 = vmatpush1.xpose.msra.mxu0 0.0
    %323 = vmatprep.subr.mxu0 0.0
    %324 = vmatpush1.xpose.msra.mxu0 0.0
    %325 = vmatprep.subr.mxu0 0.0
    %326 = vmatpush1.xpose.msra.mxu0 0.0
    %327 = vmatprep.subr.mxu0 0.0
    %328 = vmatpush1.xpose.msra.mxu0 0.0
    %329 = vmatprep.subr.mxu0 0.0
    %330 = vmatpush1.xpose.msra.mxu0 0.0
    %331 = vmatprep.subr.mxu0 0.0
    %332 = vmatpush1.xpose.msra.mxu0 0.0
    %333 = vmatprep.subr.mxu0 0.0
    %334 = vmatpush1.xpose.msra.mxu0 0.0
    %335 = vmatprep.subr.mxu0 0.0
    %336 = vmatpush1.xpose.msra.mxu0 0.0
    %337 = vmatprep.subr.mxu0 0.0
    %338 = vmatpush1.xpose.msra.mxu0 0.0
    %339 = vmatprep.subr.mxu0 0.0
    %340 = vmatpush1.xpose.msra.mxu0 0.0
    %341 = vmatprep.subr.mxu0 0.0
    %342 = vmatpush1.xpose.msra.mxu0 0.0
    %343 = vmatprep.subr.mxu0 0.0
    %344 = vmatpush1.xpose.msra.mxu0 0.0
    %345 = vmatprep.subr.mxu0 0.0
    %346 = vmatpush1.xpose.msra.mxu0 0.0
    %347 = vmatprep.subr.mxu0 0.0
    %348 = vmatpush1.xpose.msra.mxu0 0.0
    %349 = vmatprep.subr.mxu0 0.0
    %350 = vmatpush1.xpose.msra.mxu0 0.0
    %351 = vmatprep.subr.mxu0 0.0
    %352 = vmatpush1.xpose.msra.mxu0 0.0
    %353 = vmatprep.subr.mxu0 0.0
    %354 = vmatpush1.xpose.msra.mxu0 0.0
    %355 = vmatprep.subr.mxu0 0.0
    %356 = vmatpush1.xpose.msra.mxu0 0.0
    %357 = vmatprep.subr.mxu0 0.0
    %358 = vmatpush1.xpose.msra.mxu0 0.0
    %359 = vmatprep.subr.mxu0 0.0
    %360 = vmatpush1.xpose.msra.mxu0 0.0
    %361 = vmatprep.subr.mxu0 0.0
    %362 = vmatpush1.xpose.msra.mxu0 0.0
    %363 = vmatprep.subr.mxu0 0.0
    %364 = vmatpush1.xpose.msra.mxu0 0.0
    %365 = vmatprep.subr.mxu0 0.0
    %366 = vmatpush1.xpose.msra.mxu0 0.0
    %367 = vmatprep.subr.mxu0 0.0
    %368 = vmatpush1.xpose.msra.mxu0 0.0
    %369 = vmatprep.mubr.f32.mxu0 0.0
    %370 = vmatmul.mubr.f32.gmra.mrb[0].mxu0 %v300
    %v371 = vpop.f32.mrb[0].mxu0
    %v372 = vadd.f32 0.0, %v371
    %v373 = vpop.f32.mrb[0].mxu0
    %374 = vdwg.mxu0
    %v375 = vld [vmem:[#allocation2] sm:$0x1]
    %377 = vset.pattern.permute.xlu0 0
    %378 = vperm.xlu0 %377, %v375
    %v379 = vpop.permute.xlu0 %378
    %v381 = vlaneseq
    %v382 = vshrl.u32 %v381, 7
    %v383 = vsub.s32 0, %v382
    %v384 = vrot.slane %v379, %v383
    %v385 = vadd.f32 %v372, %v384
    %vm386 = vcmask 57344
    %387 = vst.msk [vmem:[#allocation3] sm:$0x1] %vm386, %v385
    // Predicated region
    $region38: #{critic_forward.1} parent=1 // pred_check
      _
    $region39: #{critic_forward.1} parent=1 // pred_check_branch
      %389 = sbr.rel (0) target = $region41
    $region40: #{critic_forward.1} parent=1 // pred_region
      %s391 = ssub.s32 16, 16
      %392 = vsyncadd [#allocation4], %s391
      %s394 = sshll.u32 [#allocation3], 4
      %s395 = int_to_ptr.vmem [resolvable:$true] %s394
      %397 = dma.vmem_to_hbm [thread:$0]  %s395, 16, %s9, [#allocation4]
    $region41: #{critic_forward.1} parent=1 // pred_fallthru
      _
    // Predicated region
    $region42: #{critic_forward.1} parent=1 // pred_check
      _
    $region43: #{critic_forward.1} parent=1 // pred_check_branch
      %399 = sbr.rel (0) target = $region45
    $region44: #{critic_forward.1} parent=1 // pred_region
      %400 = dma.done [#allocation4], 16
    $region45: #{critic_forward.1} parent=1 // pred_fallthru
      _
    %401 = vsyncpa [#allocation4], 1

</llo_original>
